<compile_context>
chip_gen: v5e
topology: v5e:2x2
jax: 0.10.0
libtpu: 0.0.40
codegen_flags: <defaults>
</compile_context>

<pallas_src>
import math

import jax
import jax.numpy as jnp
import numpy as np
from jax.experimental import pallas as pl
from jax.experimental.pallas import tpu as pltpu


def _transition_kernel(x_ref, w_ref, scale_ref, bias_ref, o_ref):
    # x_ref:     (tm, 2*Wo, 2*Cin)  tm pooled rows; sublane axis folds (dr, wo),
    #                               lane axis folds (dc, c) -- a free view of NHWC.
    # w_ref:     (Cin, tn)          1x1-conv weight tile, Cin-major.
    # scale_ref: (1, tn)            0.25 * gamma / sqrt(var + eps)   (pool folded in)
    # bias_ref:  (1, tn)            beta - mean * gamma / sqrt(var + eps)
    # o_ref:     (tm*Wo, tn)        pooled output pixels, channels on lanes.
    tm, two_wo, two_cin = x_ref.shape
    Wo, Cin = two_wo // 2, two_cin // 2
    G = tm * Wo

    # Four 2x2-window positions -> four accumulated MXU dots against the SAME
    # weight.  No concatenated (4*G, Cin) lhs is materialized: with G >= ~1k the
    # MXU fill/drain of 4 dots is already amortized, and this halves peak VMEM
    # scratch and removes a full VMEM write+read pass (vst-slot relief on v5e).
    acc = None
    for dr in (0, 1):                                      # H offset in the window
        for dc in (0, 1):                                  # W offset in the window
            part = x_ref[:, pl.ds(dr * Wo, Wo), pl.ds(dc * Cin, Cin)]  # (tm, Wo, Cin)
            y = jnp.dot(part.reshape(G, Cin), w_ref[...],
                        preferred_element_type=jnp.float32)            # (G, tn) f32
            y = jnp.maximum(y, 0.0)                                    # ReLU pre-pool
            acc = y if acc is None else acc + y

    # BatchNorm (inference) affine hoisted out of the window sum; the 1/4 pool
    # factor lives in `scale`, so the epilogue is one vmul + one vadd.
    o_ref[...] = (acc * scale_ref[...] + bias_ref[...]).astype(o_ref.dtype)


def _vmem_budget_bytes():
    """Generation-aware VMEM limit: ~half of physical per-core VMEM, capped."""
    cap = 64 * 1024 * 1024                     # safe fallback (v7x: 64 MiB per TC)
    try:
        info = pltpu.get_tpu_info()
        cap = int(getattr(info, "vmem_capacity_bytes", cap))
    except Exception:
        pass
    return max(16 * 1024 * 1024, min(cap // 2, 64 * 1024 * 1024))


def _pick_row_tile(R, Wo, Cin, tn, in_bytes, out_bytes, budget):
    """How many pooled output rows (of the image) one grid step handles."""
    # Approximate VMEM per pooled output row handled in a step:
    per_row = (2 * (2 * Wo) * (2 * Cin) * in_bytes   # input block, double-buffered
               + 2 * Wo * tn * out_bytes             # output block, double-buffered
               + 2 * Wo * Cin * in_bytes             # ~2 live (G, Cin) window slices
               + 2 * Wo * tn * 4)                    # f32 dot result + accumulator
    fixed = 2 * Cin * tn * in_bytes + 16 * tn        # weight (x2 buffers) + scale/bias
    avail = max(budget - fixed, per_row)
    tm = max(1, int(avail // per_row))

    # Output block sublane dim (tm*Wo) must stay a multiple of 8.
    g = 8 // math.gcd(Wo, 8)
    # Guarantee >= 4 grid steps along the row axis when the problem allows it:
    # feeds both TensorCores on v7x (parallel axis) and keeps DMA pipelining.
    min_steps = 4 if R >= 4 * g else (2 if R >= 2 * g else 1)
    tm = min(tm, max(g, (R + min_steps - 1) // min_steps))
    tm = max(g, (tm // g) * g)
    return min(tm, R)


def transition_block_nhwc(x_nhwc, conv_w, gamma, beta, run_mean, run_var,
                          eps=1e-5, compute_dtype=jnp.bfloat16, out_dtype=None):
    """Fused Conv1x1 -> ReLU -> BatchNorm(eval) -> AvgPool2x2, channels-last.

    Takes (N, H, W, Cin), returns (N, H/2, W/2, Cout).  This entry point has no
    host-side layout passes around the pallas_call (the window folding below is
    a free row-major reshape of NHWC).
    """
    N, H, W, Cin = x_nhwc.shape
    Cout = conv_w.shape[0]
    assert H % 2 == 0 and W % 2 == 0, "AvgPool2d(2, 2) needs even spatial dims"
    Ho, Wo = H // 2, W // 2
    R = N * Ho                                        # pooled rows across the batch

    cdt = x_nhwc.dtype if compute_dtype is None else np.dtype(compute_dtype)
    odt = x_nhwc.dtype if out_dtype is None else np.dtype(out_dtype)

    # Free view: (N, H, W, Cin) -> (N*Ho, 2*Wo, 2*Cin).  The sublane axis folds
    # (dr, wo) -> a 16+ row extent (bf16-friendly); lanes fold (dc, c).
    xr = x_nhwc.astype(cdt).reshape(R, 2 * Wo, 2 * Cin)

    # 1x1-conv weight as the (Cin, Cout) matmul rhs.
    w = conv_w[:, :, 0, 0].T.astype(cdt)

    # BatchNorm (inference) affine; fold the 1/4 average-pool factor into scale.
    inv_std = jax.lax.rsqrt(run_var.astype(jnp.float32) + jnp.float32(eps))
    s = gamma.astype(jnp.float32) * inv_std
    scale = (0.25 * s).reshape(1, Cout)
    bias = (beta.astype(jnp.float32) - run_mean.astype(jnp.float32) * s).reshape(1, Cout)

    # Optional Cout tiling (second, parallel grid axis) for wide transitions so
    # the f32 accumulator / weight tile stay bounded on v7x's 64 MiB VMEM.  The
    # activation block index ignores j, so activations are not re-fetched.
    tn = 256 if (Cout > 256 and Cout % 256 == 0) else Cout

    in_bytes = np.dtype(cdt).itemsize
    out_bytes = np.dtype(odt).itemsize
    vmem_limit = _vmem_budget_bytes()
    tm = _pick_row_tile(R, Wo, Cin, tn, in_bytes, out_bytes, (vmem_limit * 3) // 4)
    grid = ((R + tm - 1) // tm, Cout // tn)           # ragged row tail is masked

    cost = pl.CostEstimate(
        flops=2 * N * H * W * Cin * Cout,
        transcendentals=0,
        bytes_accessed=(N * H * W * Cin * in_bytes
                        + Cin * Cout * in_bytes
                        + R * Wo * Cout * out_bytes))

    out_flat = pl.pallas_call(
        _transition_kernel,
        out_shape=jax.ShapeDtypeStruct((R * Wo, Cout), odt),
        grid_spec=pltpu.PrefetchScalarGridSpec(
            num_scalar_prefetch=0,
            grid=grid,
            in_specs=[
                # Only the pooled-row axis is tiled; full window/channel extents
                # live in the last two (sublane/lane) dims.
                pl.BlockSpec((tm, 2 * Wo, 2 * Cin), lambda i, j: (i, 0, 0)),
                pl.BlockSpec((Cin, tn), lambda i, j: (0, j)),
                pl.BlockSpec((1, tn), lambda i, j: (0, j)),
                pl.BlockSpec((1, tn), lambda i, j: (0, j)),
            ],
            out_specs=pl.BlockSpec((tm * Wo, tn), lambda i, j: (i, j)),
        ),
        compiler_params=pltpu.CompilerParams(
            dimension_semantics=("parallel", "parallel"),   # megacore-shardable
            vmem_limit_bytes=vmem_limit),
        cost_estimate=cost,
    )(xr, w, scale, bias)

    return out_flat.reshape(N, Ho, Wo, Cout)


def transition_block(x_nchw, conv_w, gamma, beta, run_mean, run_var, eps=1e-5,
                     compute_dtype=jnp.bfloat16):
    """Module-exact NCHW wrapper: Conv1x1 -> ReLU -> BatchNorm(eval) -> AvgPool2x2.

    The only host-side layout work is ONE fused NCHW->NHWC transpose that also
    performs the bf16 downcast (single read of the input + half-size write),
    plus the small pooled-output transpose back to NCHW.  Callers that already
    hold channels-last activations should use `transition_block_nhwc` directly.
    """
    x_nhwc = jnp.transpose(x_nchw, (0, 2, 3, 1))
    out_nhwc = transition_block_nhwc(x_nhwc, conv_w, gamma, beta, run_mean,
                                     run_var, eps=eps,
                                     compute_dtype=compute_dtype,
                                     out_dtype=x_nchw.dtype)
    return jnp.transpose(out_nhwc, (0, 3, 1, 2))


def transition_block_ref(x, conv_w, gamma, beta, run_mean, run_var, eps=1e-5):
    """Pure-JAX reference (NCHW), mirrors the PyTorch forward in eval mode."""
    w = conv_w[:, :, 0, 0]                                # (Cout, Cin)
    y = jnp.einsum('nchw,dc->ndhw', x, w)                 # Conv1x1, no bias
    y = jnp.maximum(y, 0.0)                               # ReLU
    inv_std = 1.0 / jnp.sqrt(run_var + eps)
    y = ((y - run_mean[None, :, None, None])
         * (gamma * inv_std)[None, :, None, None]
         + beta[None, :, None, None])                     # BatchNorm (eval)
    N, C, H, W = y.shape
    return y.reshape(N, C, H // 2, 2, W // 2, 2).mean(axis=(3, 5))  # AvgPool 2x2/s2


if __name__ == "__main__":
    key = jax.random.PRNGKey(0)
    k_x, k_w, k_g, k_b, k_m, k_v = jax.random.split(key, 6)

    # Small but DenseNet-representative transition: 256 -> 128 channels, 16x16 -> 8x8.
    N, Cin, H, W = 2, 256, 16, 16
    Cout = 128

    # Small-integer / power-of-two inputs are exactly representable in bf16 and
    # accumulate exactly in f32, so the bf16-by-default kernel can still be
    # checked against the f32 reference to tight tolerance.
    x = jax.random.randint(k_x, (N, Cin, H, W), -3, 4).astype(jnp.float32)
    conv_w = (jax.random.randint(k_w, (Cout, Cin, 1, 1), -2, 3)
              .astype(jnp.float32) * 0.0625)
    gamma = jax.random.normal(k_g, (Cout,), jnp.float32) * 0.1 + 1.0
    beta = jax.random.normal(k_b, (Cout,), jnp.float32) * 0.1
    run_mean = jax.random.normal(k_m, (Cout,), jnp.float32) * 0.1
    run_var = jnp.abs(jax.random.normal(k_v, (Cout,), jnp.float32)) + 0.5

    out = transition_block(x, conv_w, gamma, beta, run_mean, run_var)
    out = jax.block_until_ready(out)

    ref = transition_block_ref(x, conv_w, gamma, beta, run_mean, run_var)
    np.testing.assert_allclose(np.asarray(out), np.asarray(ref),
                               rtol=1e-4, atol=1e-3)
    assert out.shape == (N, Cout, H // 2, W // 2)
    print("KERNEL_OK")
</pallas_src>

<mosaic_0001>
module attributes {stable_mosaic.version = 11 : i64} {
  func.func @_transition_kernel(%arg0: i32, %arg1: i32, %arg2: memref<4x16x512xbf16, #tpu.memory_space<vmem>>, %arg3: memref<256x128xbf16, #tpu.memory_space<vmem>>, %arg4: memref<1x128xf32, #tpu.memory_space<vmem>>, %arg5: memref<1x128xf32, #tpu.memory_space<vmem>>, %arg6: memref<32x128xf32, #tpu.memory_space<vmem>>) attributes {dimension_semantics = [#tpu.dimension_semantics<parallel>, #tpu.dimension_semantics<parallel>], iteration_bounds = array<i64: 4, 1>, scalar_prefetch = 0 : i64, scratch_operands = 0 : i64, tpu.core_type = #tpu.core_type<tc>, window_params = [{transform_indices = @transform_0, window_bounds = array<i64: 4, 16, 512>}, {transform_indices = @transform_1, window_bounds = array<i64: 256, 128>}, {transform_indices = @transform_2, window_bounds = array<i64: 1, 128>}, {transform_indices = @transform_3, window_bounds = array<i64: 1, 128>}, {transform_indices = @transform_4, window_bounds = array<i64: 32, 128>}]} {
    %c0 = arith.constant 0 : index
    %c0_0 = arith.constant 0 : index
    %c0_1 = arith.constant 0 : index
    %0 = vector.load %arg2[%c0, %c0_0, %c0_1] : memref<4x16x512xbf16, #tpu.memory_space<vmem>>, vector<4x8x256xbf16>
    %1 = vector.shape_cast %0 : vector<4x8x256xbf16> to vector<32x256xbf16>
    %c0_2 = arith.constant 0 : index
    %c0_3 = arith.constant 0 : index
    %2 = vector.load %arg3[%c0_2, %c0_3] : memref<256x128xbf16, #tpu.memory_space<vmem>>, vector<256x128xbf16>
    %cst = arith.constant dense<0.000000e+00> : vector<32x128xf32>
    %3 = tpu.matmul %1, %2, %cst {dimension_numbers = #tpu.dot_dimension_numbers<[1], [0], [0], [1], [0, 0, 1, 1], [], []>} : vector<32x256xbf16>, vector<256x128xbf16>, vector<32x128xf32> -> vector<32x128xf32>
    %cst_4 = arith.constant 0.000000e+00 : f32
    %4 = vector.broadcast %cst_4 : f32 to vector<32x128xf32>
    %5 = arith.maximumf %3, %4 : vector<32x128xf32>
    %c0_5 = arith.constant 0 : index
    %c0_6 = arith.constant 0 : index
    %c256 = arith.constant 256 : index
    %6 = vector.load %arg2[%c0_5, %c0_6, %c256] : memref<4x16x512xbf16, #tpu.memory_space<vmem>>, vector<4x8x256xbf16>
    %7 = vector.shape_cast %6 : vector<4x8x256xbf16> to vector<32x256xbf16>
    %c0_7 = arith.constant 0 : index
    %c0_8 = arith.constant 0 : index
    %8 = vector.load %arg3[%c0_7, %c0_8] : memref<256x128xbf16, #tpu.memory_space<vmem>>, vector<256x128xbf16>
    %cst_9 = arith.constant dense<0.000000e+00> : vector<32x128xf32>
    %9 = tpu.matmul %7, %8, %cst_9 {dimension_numbers = #tpu.dot_dimension_numbers<[1], [0], [0], [1], [0, 0, 1, 1], [], []>} : vector<32x256xbf16>, vector<256x128xbf16>, vector<32x128xf32> -> vector<32x128xf32>
    %cst_10 = arith.constant 0.000000e+00 : f32
    %10 = vector.broadcast %cst_10 : f32 to vector<32x128xf32>
    %11 = arith.maximumf %9, %10 : vector<32x128xf32>
    %12 = arith.addf %5, %11 : vector<32x128xf32>
    %c0_11 = arith.constant 0 : index
    %c8 = arith.constant 8 : index
    %c0_12 = arith.constant 0 : index
    %13 = vector.load %arg2[%c0_11, %c8, %c0_12] : memref<4x16x512xbf16, #tpu.memory_space<vmem>>, vector<4x8x256xbf16>
    %14 = vector.shape_cast %13 : vector<4x8x256xbf16> to vector<32x256xbf16>
    %c0_13 = arith.constant 0 : index
    %c0_14 = arith.constant 0 : index
    %15 = vector.load %arg3[%c0_13, %c0_14] : memref<256x128xbf16, #tpu.memory_space<vmem>>, vector<256x128xbf16>
    %cst_15 = arith.constant dense<0.000000e+00> : vector<32x128xf32>
    %16 = tpu.matmul %14, %15, %cst_15 {dimension_numbers = #tpu.dot_dimension_numbers<[1], [0], [0], [1], [0, 0, 1, 1], [], []>} : vector<32x256xbf16>, vector<256x128xbf16>, vector<32x128xf32> -> vector<32x128xf32>
    %cst_16 = arith.constant 0.000000e+00 : f32
    %17 = vector.broadcast %cst_16 : f32 to vector<32x128xf32>
    %18 = arith.maximumf %16, %17 : vector<32x128xf32>
    %19 = arith.addf %12, %18 : vector<32x128xf32>
    %c0_17 = arith.constant 0 : index
    %c8_18 = arith.constant 8 : index
    %c256_19 = arith.constant 256 : index
    %20 = vector.load %arg2[%c0_17, %c8_18, %c256_19] : memref<4x16x512xbf16, #tpu.memory_space<vmem>>, vector<4x8x256xbf16>
    %21 = vector.shape_cast %20 : vector<4x8x256xbf16> to vector<32x256xbf16>
    %c0_20 = arith.constant 0 : index
    %c0_21 = arith.constant 0 : index
    %22 = vector.load %arg3[%c0_20, %c0_21] : memref<256x128xbf16, #tpu.memory_space<vmem>>, vector<256x128xbf16>
    %cst_22 = arith.constant dense<0.000000e+00> : vector<32x128xf32>
    %23 = tpu.matmul %21, %22, %cst_22 {dimension_numbers = #tpu.dot_dimension_numbers<[1], [0], [0], [1], [0, 0, 1, 1], [], []>} : vector<32x256xbf16>, vector<256x128xbf16>, vector<32x128xf32> -> vector<32x128xf32>
    %cst_23 = arith.constant 0.000000e+00 : f32
    %24 = vector.broadcast %cst_23 : f32 to vector<32x128xf32>
    %25 = arith.maximumf %23, %24 : vector<32x128xf32>
    %26 = arith.addf %19, %25 : vector<32x128xf32>
    %c0_24 = arith.constant 0 : index
    %c0_25 = arith.constant 0 : index
    %27 = vector.load %arg4[%c0_24, %c0_25] : memref<1x128xf32, #tpu.memory_space<vmem>>, vector<1x128xf32>
    %28 = vector.broadcast %27 : vector<1x128xf32> to vector<32x128xf32>
    %29 = arith.mulf %26, %28 : vector<32x128xf32>
    %c0_26 = arith.constant 0 : index
    %c0_27 = arith.constant 0 : index
    %30 = vector.load %arg5[%c0_26, %c0_27] : memref<1x128xf32, #tpu.memory_space<vmem>>, vector<1x128xf32>
    %31 = vector.broadcast %30 : vector<1x128xf32> to vector<32x128xf32>
    %32 = arith.addf %29, %31 : vector<32x128xf32>
    %c0_28 = arith.constant 0 : index
    %c0_29 = arith.constant 0 : index
    %33 = vector.load %arg6[%c0_28, %c0_29] : memref<32x128xf32, #tpu.memory_space<vmem>>, vector<32x128xf32>
    tpu.vector_store %arg6[%c0_28, %c0_29], %32 {strides = array<i32>} : memref<32x128xf32, #tpu.memory_space<vmem>>, vector<32x128xf32>,
    return
  }
  func.func @transform_0(%arg0: i32, %arg1: i32) -> (i32, i32, i32) {
    %c0_i32 = arith.constant 0 : i32
    %c0_i32_0 = arith.constant 0 : i32
    %c0_i32_1 = arith.constant 0 : i32
    return %arg0, %c0_i32, %c0_i32_0 : i32, i32, i32
  }
  func.func @transform_1(%arg0: i32, %arg1: i32) -> (i32, i32) {
    %c0_i32 = arith.constant 0 : i32
    %c0_i32_0 = arith.constant 0 : i32
    return %c0_i32, %arg1 : i32, i32
  }
  func.func @transform_2(%arg0: i32, %arg1: i32) -> (i32, i32) {
    %c0_i32 = arith.constant 0 : i32
    %c0_i32_0 = arith.constant 0 : i32
    return %c0_i32, %arg1 : i32, i32
  }
  func.func @transform_3(%arg0: i32, %arg1: i32) -> (i32, i32) {
    %c0_i32 = arith.constant 0 : i32
    %c0_i32_0 = arith.constant 0 : i32
    return %c0_i32, %arg1 : i32, i32
  }
  func.func @transform_4(%arg0: i32, %arg1: i32) -> (i32, i32) {
    %c0_i32 = arith.constant 0 : i32
    return %arg0, %arg1 : i32, i32
  }
}

</mosaic_0001>

<llo_original>
// kernel: tpu_custom_call.1
$region0: #{tpu_custom_call.1}
  #allocation0 [shape = 'u32[]', space=smem, size = 0x4, offset = 0x4, fixed_abs, tag = 'smem constant byte address 0x4 - core index']
  #allocation1 [shape = 'u32[72,128]{1,0:T(1,128)}', space=vmem, size = 0x9000, scoped, tag = 'internal scratch']
  %s0 = inlined_call_operand.hbm [shape: bf16[16,16,512], index: 0, kind: input, shape index: {}]
  %s1 = inlined_call_operand.hbm [shape: bf16[256,128], index: 1, kind: input, shape index: {}]
  %s2 = inlined_call_operand.vmem [shape: f32[1,128], index: 2, kind: input, shape index: {}]
  %s3 = inlined_call_operand.vmem [shape: f32[1,128], index: 3, kind: input, shape index: {}]
  %s4 = inlined_call_operand.hbm [shape: f32[128,128], index: 4, kind: output, shape index: {}]
  %s5 = sld [smem:[#allocation0]]
  $region57: #{tpu_custom_call.1} parent=0
    _
  %s7 = ssub.s32 1, %s5
  %s8 = scalar_select 0, %s7, %s5
  $region1: #{tpu_custom_call.1} parent=0
    #allocation2 [shape = 'u8[131072]{0}', space=vmem, size = 0x20000, scoped, tag = 'input window, operand 0']
    #allocation3 [shape = 's32[2]{0}', space=sflag, size = 0x8, scoped, tag = 'scoped memory for tpu_custom_call.1']
    #allocation4 [shape = 's32[2]{0}', space=sflag, size = 0x8, scoped, tag = 'scoped memory for tpu_custom_call.1']
    #allocation5 [shape = 'u8[65536]{0}', space=vmem, size = 0x10000, scoped, tag = 'input window, operand 1, single buffered']
    #allocation6 [shape = 's32[1]{0}', space=sflag, size = 0x4, scoped, tag = 'scoped memory for tpu_custom_call.1']
    #allocation7 [shape = 'u8[32768]{0}', space=vmem, size = 0x8000, scoped, tag = 'output window, operand 0']
    %9 = vsyncpa [#allocation3], 0
    %s10 = scalar_lea.sflag [#allocation3], 1
    %11 = vsyncpa %s10, 0
    %12 = vsyncpa [#allocation6], 0
    %13 = vsyncpa [#allocation4], 0
    %s14 = scalar_lea.sflag [#allocation4], 1
    %15 = vsyncpa %s14, 0
    loop: start=0, step=1, limit=6
    $region2: #{tpu_custom_call.1} parent=1 // loop_pre_header
      _
    $region3: #{tpu_custom_call.1} parent=1 // loop_header
      %s17 = sphi 0, %s21
      %p18 = scmp.ge.s32.totalorder %s17, 6
      %s24 = sphi 0, %s36
      %s25 = sphi 0, %s32
      %s26 = sphi 0, %s24
      %s27 = sphi 0, %s25
      %s28 = sphi 0, %s26
      %s29 = sphi 0, %s27
      %s39 = sphi 0, %s41
      %s42 = sphi 0, %s39
      %s43 = sphi 0, %s42
      %s59 = sphi 0, %s43
      %s65 = sphi 0, %s67
      %s68 = sphi 0, %s65
      %s69 = sphi 0, %s68
      %s85 = sphi 0, %s69
      %s91 = sphi 0, %s93
      %s94 = sphi 0, %s91
      %s95 = sphi 0, %s94
      %s111 = sphi 0, %s95
      %s117 = sphi 0, %s119
      %s120 = sphi 0, %s117
      %s121 = sphi 0, %s120
      %s137 = sphi 0, %s121
      %s145 = sphi 0, %s147
      %s148 = sphi 0, %s145
      %s149 = sphi 0, %s148
      %s165 = sphi 0, %s149
    $region4: #{tpu_custom_call.1} parent=1 // loop_header_branch
      %20 = sbr.rel (%p18) target = $region8
    $region5: #{tpu_custom_call.1} parent=1 // loop_body
      %s22 = ssub.s32 %s17, 1
      %s23 = ssub.s32 %s17, 2
      %s30 = sadd.s32 1, %s25
      %p31 = scmp.ge.s32.totalorder %s30, 1
      %s32 = scalar_select %p31, 0, %s30
      %s33 = sadd.s32 1, %s24
      %s34 = scalar_select %p31, %s33, %s24
      %p35 = scmp.ge.s32.totalorder %s34, 4
      %s36 = scalar_select %p35, 0, %s34
      %s37 = ssub.s32 %s24, %s36
      %p38 = scmp.eq.s32.totalorder %s37, 0
      %s40 = sadd.s32 %s39, 1
      %s41 = scalar_select %p38, %s39, %s40
      %p44 = pneg %p38
      %p45 = scmp.eq.s32.totalorder %s17, 3
      %p46 = por %p44, %p45
      %p47 = scmp.ne.s32.totalorder %s39, %s42
      %p48 = scmp.eq.s32.totalorder %s17, 0
      %p49 = por %p47, %p48
      %p50 = scmp.ne.s32.totalorder %s39, %s42
      %p51 = scmp.eq.s32.totalorder %s22, 3
      %p52 = por %p50, %p51
      %p53 = scmp.ne.s32.totalorder %s42, %s43
      %p54 = scmp.eq.s32.totalorder %s22, 0
      %p55 = por %p53, %p54
      %p56 = scmp.ne.s32.totalorder %s42, %s43
      %p57 = scmp.eq.s32.totalorder %s23, 3
      %p58 = por %p56, %p57
      %p60 = scmp.ne.s32.totalorder %s43, %s59
      %p61 = scmp.eq.s32.totalorder %s23, 0
      %p62 = por %p60, %p61
      %s63 = ssub.s32 %s25, %s32
      %p64 = scmp.eq.s32.totalorder %s63, 0
      %s66 = sadd.s32 %s65, 1
      %s67 = scalar_select %p64, %s65, %s66
      %p70 = pneg %p64
      %p71 = scmp.eq.s32.totalorder %s17, 3
      %p72 = por %p70, %p71
      %p73 = scmp.ne.s32.totalorder %s65, %s68
      %p74 = scmp.eq.s32.totalorder %s17, 0
      %p75 = por %p73, %p74
      %p76 = scmp.ne.s32.totalorder %s65, %s68
      %p77 = scmp.eq.s32.totalorder %s22, 3
      %p78 = por %p76, %p77
      %p79 = scmp.ne.s32.totalorder %s68, %s69
      %p80 = scmp.eq.s32.totalorder %s22, 0
      %p81 = por %p79, %p80
      %p82 = scmp.ne.s32.totalorder %s68, %s69
      %p83 = scmp.eq.s32.totalorder %s23, 3
      %p84 = por %p82, %p83
      %p86 = scmp.ne.s32.totalorder %s69, %s85
      %p87 = scmp.eq.s32.totalorder %s23, 0
      %p88 = por %p86, %p87
      %s89 = ssub.s32 %s25, %s32
      %p90 = scmp.eq.s32.totalorder %s89, 0
      %s92 = sadd.s32 %s91, 1
      %s93 = scalar_select %p90, %s91, %s92
      %p96 = pneg %p90
      %p97 = scmp.eq.s32.totalorder %s17, 3
      %p98 = por %p96, %p97
      %p99 = scmp.ne.s32.totalorder %s91, %s94
      %p100 = scmp.eq.s32.totalorder %s17, 0
      %p101 = por %p99, %p100
      %p102 = scmp.ne.s32.totalorder %s91, %s94
      %p103 = scmp.eq.s32.totalorder %s22, 3
      %p104 = por %p102, %p103
      %p105 = scmp.ne.s32.totalorder %s94, %s95
      %p106 = scmp.eq.s32.totalorder %s22, 0
      %p107 = por %p105, %p106
      %p108 = scmp.ne.s32.totalorder %s94, %s95
      %p109 = scmp.eq.s32.totalorder %s23, 3
      %p110 = por %p108, %p109
      %p112 = scmp.ne.s32.totalorder %s95, %s111
      %p113 = scmp.eq.s32.totalorder %s23, 0
      %p114 = por %p112, %p113
      %s115 = ssub.s32 %s25, %s32
      %p116 = scmp.eq.s32.totalorder %s115, 0
      %s118 = sadd.s32 %s117, 1
      %s119 = scalar_select %p116, %s117, %s118
      %p122 = pneg %p116
      %p123 = scmp.eq.s32.totalorder %s17, 3
      %p124 = por %p122, %p123
      %p125 = scmp.ne.s32.totalorder %s117, %s120
      %p126 = scmp.eq.s32.totalorder %s17, 0
      %p127 = por %p125, %p126
      %p128 = scmp.ne.s32.totalorder %s117, %s120
      %p129 = scmp.eq.s32.totalorder %s22, 3
      %p130 = por %p128, %p129
      %p131 = scmp.ne.s32.totalorder %s120, %s121
      %p132 = scmp.eq.s32.totalorder %s22, 0
      %p133 = por %p131, %p132
      %p134 = scmp.ne.s32.totalorder %s120, %s121
      %p135 = scmp.eq.s32.totalorder %s23, 3
      %p136 = por %p134, %p135
      %p138 = scmp.ne.s32.totalorder %s121, %s137
      %p139 = scmp.eq.s32.totalorder %s23, 0
      %p140 = por %p138, %p139
      %s141 = ssub.s32 %s24, %s36
      %s142 = ssub.s32 %s25, %s32
      %s143 = sor.u32 %s141, %s142
      %p144 = scmp.eq.s32.totalorder %s143, 0
      %s146 = sadd.s32 %s145, 1
      %s147 = scalar_select %p144, %s145, %s146
      %p150 = pneg %p144
      %p151 = scmp.eq.s32.totalorder %s17, 3
      %p152 = por %p150, %p151
      %p153 = scmp.ne.s32.totalorder %s145, %s148
      %p154 = scmp.eq.s32.totalorder %s17, 0
      %p155 = por %p153, %p154
      %p156 = scmp.ne.s32.totalorder %s145, %s148
      %p157 = scmp.eq.s32.totalorder %s22, 3
      %p158 = por %p156, %p157
      %p159 = scmp.ne.s32.totalorder %s148, %s149
      %p160 = scmp.eq.s32.totalorder %s22, 0
      %p161 = por %p159, %p160
      %p162 = scmp.ne.s32.totalorder %s148, %s149
      %p163 = scmp.eq.s32.totalorder %s23, 3
      %p164 = por %p162, %p163
      %p166 = scmp.ne.s32.totalorder %s149, %s165
      %p167 = scmp.eq.s32.totalorder %s23, 0
      %p168 = por %p166, %p167
      %p169 = scmp.le.s32.totalorder 1, %s17
      %p170 = scmp.lt.s32.totalorder %s17, 5
      %p171 = pnand %p169, %p170
      %p172 = pneg %p171
      // Predicated region
      $region9: #{tpu_custom_call.1} parent=5 // pred_check
        _
      $region10: #{tpu_custom_call.1} parent=5 // pred_check_branch
        %174 = sbr.rel (%p171) target = $region12
      $region11: #{tpu_custom_call.1} parent=5 // pred_region
        %s175 = ssub.s32 %s17, 1
        // Predicated region
        $region13: #{tpu_custom_call.1} parent=11 // pred_check
          %p176 = pneg %p81
        $region14: #{tpu_custom_call.1} parent=11 // pred_check_branch
          %178 = sbr.rel (%p176) target = $region16
        $region15: #{tpu_custom_call.1} parent=11 // pred_region
          %180 = vsyncadd [#allocation6], 0
          %s181 = smul.addr %s27, 4
          %s182 = scalar_lea.hbm %s1, %s181
          %s183 = sshll.u32 %s182, 4
          %s184 = int_to_ptr.hbm [resolvable:$true] %s183
          %s185 = sshll.u32 [#allocation5], 4
          %s186 = int_to_ptr.vmem [resolvable:$true] %s185
          %191 = dma.hbm_to_vmem [thread:$0]  %s184, 2048, %s186, [#allocation6], 64, 64, 4
        $region16: #{tpu_custom_call.1} parent=11 // pred_fallthru
          _
        // Predicated region
        $region17: #{tpu_custom_call.1} parent=11 // pred_check
          %p192 = pneg %p107
        $region18: #{tpu_custom_call.1} parent=11 // pred_check_branch
          %194 = sbr.rel (%p192) target = $region20
        $region19: #{tpu_custom_call.1} parent=11 // pred_region
          %p195 = scmp.lt.s32.totalorder %s27, 0
          %s196 = scalar_select %p195, %s27, 0
          %s197 = scalar_lea.vmem %s2, %s196
        $region20: #{tpu_custom_call.1} parent=11 // pred_fallthru
          _
        // Predicated region
        $region21: #{tpu_custom_call.1} parent=11 // pred_check
          %p198 = pneg %p133
        $region22: #{tpu_custom_call.1} parent=11 // pred_check_branch
          %200 = sbr.rel (%p198) target = $region24
        $region23: #{tpu_custom_call.1} parent=11 // pred_region
          %p201 = scmp.lt.s32.totalorder %s27, 0
          %s202 = scalar_select %p201, %s27, 0
          %s203 = scalar_lea.vmem %s3, %s202
        $region24: #{tpu_custom_call.1} parent=11 // pred_fallthru
          _
      $region12: #{tpu_custom_call.1} parent=5 // pred_fallthru
        _
      %p204 = scmp.lt.s32.totalorder %s17, 4
      // Predicated region
      $region25: #{tpu_custom_call.1} parent=5 // pred_check
        %p205 = pneg %p204
      $region26: #{tpu_custom_call.1} parent=5 // pred_check_branch
        %207 = sbr.rel (%p205) target = $region28
      $region27: #{tpu_custom_call.1} parent=5 // pred_region
        // Predicated region
        $region29: #{tpu_custom_call.1} parent=27 // pred_check
          %p208 = pneg %p49
        $region30: #{tpu_custom_call.1} parent=27 // pred_check_branch
          %210 = sbr.rel (%p208) target = $region32
        $region31: #{tpu_custom_call.1} parent=27 // pred_region
          %s211 = sand.u32 %s39, 1
          %s212 = scalar_lea.sflag [#allocation3], %s211
          %s213 = sand.u32 %s39, 1
          %s214 = smul.addr %s213, 128
          %s215 = scalar_lea.vmem [#allocation2], %s214
          %s216 = smul.u32 4, %s24
          %218 = vsyncadd %s212, 0
          %s219 = smul.addr %s216, 8
          %s220 = smul.addr %s219, 4
          %s221 = scalar_lea.hbm %s0, %s220
          %s222 = sshll.u32 %s221, 4
          %s223 = int_to_ptr.hbm [resolvable:$true] %s222
          %s224 = sshll.u32 %s215, 4
          %s225 = int_to_ptr.vmem [resolvable:$true] %s224
          %230 = dma.hbm_to_vmem [thread:$0]  %s223, 2048, %s225, %s212, 256, 256, 16
        $region32: #{tpu_custom_call.1} parent=27 // pred_fallthru
          _
      $region28: #{tpu_custom_call.1} parent=5 // pred_fallthru
        _
      %p231 = scmp.le.s32.totalorder 1, %s17
      %p232 = scmp.lt.s32.totalorder %s17, 5
      %p233 = pnand %p231, %p232
      %p234 = pneg %p233
      // Predicated region
      $region33: #{tpu_custom_call.1} parent=5 // pred_check
        _
      $region34: #{tpu_custom_call.1} parent=5 // pred_check_branch
        %236 = sbr.rel (%p233) target = $region36
      $region35: #{tpu_custom_call.1} parent=5 // pred_region
        %s237 = ssub.s32 %s17, 1
        %s238 = sand.u32 %s42, 1
        %s239 = scalar_lea.sflag [#allocation3], %s238
        %s240 = sand.u32 %s42, 1
        %s241 = smul.addr %s240, 128
        %s242 = scalar_lea.vmem [#allocation2], %s241
        // Predicated region
        $region37: #{tpu_custom_call.1} parent=35 // pred_check
          %p243 = pneg %p55
        $region38: #{tpu_custom_call.1} parent=35 // pred_check_branch
          %245 = sbr.rel (%p243) target = $region40
        $region39: #{tpu_custom_call.1} parent=35 // pred_region
          %247 = dma.done %s239, 2048
        $region40: #{tpu_custom_call.1} parent=35 // pred_fallthru
          _
        // Predicated region
        $region41: #{tpu_custom_call.1} parent=35 // pred_check
          %p248 = pneg %p81
        $region42: #{tpu_custom_call.1} parent=35 // pred_check_branch
          %250 = sbr.rel (%p248) target = $region44
        $region43: #{tpu_custom_call.1} parent=35 // pred_region
          %252 = dma.done [#allocation6], 2048
        $region44: #{tpu_custom_call.1} parent=35 // pred_fallthru
          _
        %s253 = sand.u32 %s42, 1
        %s254 = scalar_lea.sflag [#allocation3], %s253
        %s255 = sand.u32 %s42, 1
        %s256 = smul.addr %s255, 128
        %s257 = scalar_lea.vmem [#allocation2], %s256
        %p258 = pneg %p55
        %p259 = pneg %p52
        %p260 = pneg %p81
        %p261 = pneg %p78
        %p262 = scmp.lt.s32.totalorder %s27, 0
        %s263 = scalar_select %p262, %s27, 0
        %s264 = scalar_lea.vmem %s2, %s263
        %p265 = pneg %p107
        %p266 = pneg %p104
        %p267 = scmp.lt.s32.totalorder %s27, 0
        %s268 = scalar_select %p267, %s27, 0
        %s269 = scalar_lea.vmem %s3, %s268
        %p270 = pneg %p133
        %p271 = pneg %p130
        %p272 = pneg %p161
        %p273 = pneg %p158
        %s274 = sand.u32 %s148, 1
        %s275 = scalar_lea.sflag [#allocation4], %s274
        %s276 = sand.u32 %s148, 1
        %s277 = smul.addr %s276, 32
        %s278 = scalar_lea.vmem [#allocation7], %s277
        %s279 = smul.u32 4, %s26
        %p280 = scmp.lt.s32.totalorder %s27, 0
        %s281 = scalar_select %p280, %s27, 0
        %s282 = scalar_lea.vmem %s2, %s281
        %p283 = scmp.lt.s32.totalorder %s27, 0
        %s284 = scalar_select %p283, %s27, 0
        %s285 = scalar_lea.vmem %s3, %s284
        %s286 = smul.u32 4, %s26
        %v287 = vld [vmem:[%s242] sm:$0xff]
        %v288 = vld [vmem:[%s242 + $0x20] sm:$0xff]
        %v289 = vld [vmem:[%s242 + $0x40] sm:$0xff]
        %v290 = vld [vmem:[%s242 + $0x60] sm:$0xff]
        %v291 = vld [vmem:[#allocation5] sm:$0xf]
        %v292 = vld [vmem:[#allocation5 + $0x4] sm:$0xf]
        %v293 = vld [vmem:[#allocation5 + $0x8] sm:$0xf]
        %v294 = vld [vmem:[#allocation5 + $0xc] sm:$0xf]
        %v295 = vld [vmem:[#allocation5 + $0x10] sm:$0xf]
        %v296 = vld [vmem:[#allocation5 + $0x14] sm:$0xf]
        %v297 = vld [vmem:[#allocation5 + $0x18] sm:$0xf]
        %v298 = vld [vmem:[#allocation5 + $0x1c] sm:$0xf]
        %v299 = vld [vmem:[#allocation5 + $0x20] sm:$0xf]
        %v300 = vld [vmem:[#allocation5 + $0x24] sm:$0xf]
        %v301 = vld [vmem:[#allocation5 + $0x28] sm:$0xf]
        %v302 = vld [vmem:[#allocation5 + $0x2c] sm:$0xf]
        %v303 = vld [vmem:[#allocation5 + $0x30] sm:$0xf]
        %v304 = vld [vmem:[#allocation5 + $0x34] sm:$0xf]
        %v305 = vld [vmem:[#allocation5 + $0x38] sm:$0xf]
        %v306 = vld [vmem:[#allocation5 + $0x3c] sm:$0xf]
        %v307 = vld [vmem:[#allocation5 + $0x40] sm:$0xf]
        %v308 = vld [vmem:[#allocation5 + $0x44] sm:$0xf]
        %v309 = vld [vmem:[#allocation5 + $0x48] sm:$0xf]
        %v310 = vld [vmem:[#allocation5 + $0x4c] sm:$0xf]
        %v311 = vld [vmem:[#allocation5 + $0x50] sm:$0xf]
        %v312 = vld [vmem:[#allocation5 + $0x54] sm:$0xf]
        %v313 = vld [vmem:[#allocation5 + $0x58] sm:$0xf]
        %v314 = vld [vmem:[#allocation5 + $0x5c] sm:$0xf]
        %v315 = vld [vmem:[#allocation5 + $0x60] sm:$0xf]
        %v316 = vld [vmem:[#allocation5 + $0x64] sm:$0xf]
        %v317 = vld [vmem:[#allocation5 + $0x68] sm:$0xf]
        %v318 = vld [vmem:[#allocation5 + $0x6c] sm:$0xf]
        %v319 = vld [vmem:[#allocation5 + $0x70] sm:$0xf]
        %v320 = vld [vmem:[#allocation5 + $0x74] sm:$0xf]
        %v321 = vld [vmem:[#allocation5 + $0x78] sm:$0xf]
        %v322 = vld [vmem:[#allocation5 + $0x7c] sm:$0xf]
        %v327 = vunpack.c.l.b16 %v287
        %v328 = vunpack.c.h.b16 %v287
        %v329 = vunpack.c.l.b16 %v288
        %v330 = vunpack.c.h.b16 %v288
        %v331 = vunpack.c.l.b16 %v289
        %v332 = vunpack.c.h.b16 %v289
        %v333 = vunpack.c.l.b16 %v290
        %v334 = vunpack.c.h.b16 %v290
        %v335 = vpack.c.b16 %v329, %v327
        %v336 = vpack.c.b16 %v330, %v328
        %v337 = vpack.c.b16 %v333, %v331
        %v338 = vpack.c.b16 %v334, %v332
        %v375 = vunpack.c.l.b16 %v291
        %v376 = vunpack.c.l.b16 %v292
        %v377 = vunpack.c.l.b16 %v293
        %v378 = vunpack.c.l.b16 %v294
        %v379 = vunpack.c.l.b16 %v295
        %v380 = vunpack.c.l.b16 %v296
        %v381 = vunpack.c.l.b16 %v297
        %v382 = vunpack.c.l.b16 %v298
        %v383 = vunpack.c.l.b16 %v299
        %v384 = vunpack.c.l.b16 %v300
        %v385 = vunpack.c.l.b16 %v301
        %v386 = vunpack.c.l.b16 %v302
        %v387 = vunpack.c.l.b16 %v303
        %v388 = vunpack.c.l.b16 %v304
        %v389 = vunpack.c.l.b16 %v305
        %v390 = vunpack.c.l.b16 %v306
        %v391 = vunpack.c.l.b16 %v307
        %v392 = vunpack.c.l.b16 %v308
        %v393 = vunpack.c.l.b16 %v309
        %v394 = vunpack.c.l.b16 %v310
        %v395 = vunpack.c.l.b16 %v311
        %v396 = vunpack.c.l.b16 %v312
        %v397 = vunpack.c.l.b16 %v313
        %v398 = vunpack.c.l.b16 %v314
        %v399 = vunpack.c.l.b16 %v315
        %v400 = vunpack.c.l.b16 %v316
        %v401 = vunpack.c.l.b16 %v317
        %v402 = vunpack.c.l.b16 %v318
        %v403 = vunpack.c.l.b16 %v319
        %v404 = vunpack.c.l.b16 %v320
        %v405 = vunpack.c.l.b16 %v321
        %v406 = vunpack.c.l.b16 %v322
        %v407 = vpack.c.b16 %v376, %v375
        %v408 = vpack.c.b16 %v378, %v377
        %v409 = vpack.c.b16 %v380, %v379
        %v410 = vpack.c.b16 %v382, %v381
        %v411 = vpack.c.b16 %v384, %v383
        %v412 = vpack.c.b16 %v386, %v385
        %v413 = vpack.c.b16 %v388, %v387
        %v414 = vpack.c.b16 %v390, %v389
        %v415 = vpack.c.b16 %v392, %v391
        %v416 = vpack.c.b16 %v394, %v393
        %v417 = vpack.c.b16 %v396, %v395
        %v418 = vpack.c.b16 %v398, %v397
        %v419 = vpack.c.b16 %v400, %v399
        %v420 = vpack.c.b16 %v402, %v401
        %v421 = vpack.c.b16 %v404, %v403
        %v422 = vpack.c.b16 %v406, %v405
        %439 = vmatpush.bf16.msra.mxu0 %v414
        %440 = vmatpush.bf16.msra.mxu0 %v413
        %441 = vmatpush.bf16.msra.mxu0 %v412
        %442 = vmatpush.bf16.msra.mxu0 %v411
        %443 = vmatpush.bf16.msra.mxu0 %v410
        %444 = vmatpush.bf16.msra.mxu0 %v409
        %445 = vmatpush.bf16.msra.mxu0 %v408
        %446 = vmatpush.bf16.msra.mxu0 %v407
        %447 = vmatmul.bf16.gmra.mxu0 %v335
        %v448 = vpop.f32.mrf.mxu0
        %v449 = vadd.f32 0.0, %v448
        %v450 = vpop.f32.mrf.mxu0
        %v451 = vadd.f32 0.0, %v450
        %452 = vmatmul.bf16.gmra.mxu0 %v337
        %v453 = vpop.f32.mrf.mxu0
        %v454 = vadd.f32 0.0, %v453
        %v455 = vpop.f32.mrf.mxu0
        %v456 = vadd.f32 0.0, %v455
        %457 = vdwg.mxu0
        %458 = vmatpush.bf16.msra.mxu0 %v422
        %459 = vmatpush.bf16.msra.mxu0 %v421
        %460 = vmatpush.bf16.msra.mxu0 %v420
        %461 = vmatpush.bf16.msra.mxu0 %v419
        %462 = vmatpush.bf16.msra.mxu0 %v418
        %463 = vmatpush.bf16.msra.mxu0 %v417
        %464 = vmatpush.bf16.msra.mxu0 %v416
        %465 = vmatpush.bf16.msra.mxu0 %v415
        %466 = vmatmul.bf16.gmra.mxu0 %v336
        %v467 = vpop.f32.mrf.mxu0
        %v468 = vadd.f32 %v449, %v467
        %v469 = vpop.f32.mrf.mxu0
        %v470 = vadd.f32 %v451, %v469
        %471 = vmatmul.bf16.gmra.mxu0 %v338
        %v472 = vpop.f32.mrf.mxu0
        %v473 = vadd.f32 %v454, %v472
        %v474 = vpop.f32.mrf.mxu0
        %v475 = vadd.f32 %v456, %v474
        %476 = vdwg.mxu0
        %v477 = vmax.f32 %v468, 0.0
        %v478 = vmax.f32 %v470, 0.0
        %v479 = vmax.f32 %v473, 0.0
        %v480 = vmax.f32 %v475, 0.0
        %v481 = vld [vmem:[%s242 + $0x8] sm:$0xff]
        %v482 = vld [vmem:[%s242 + $0x28] sm:$0xff]
        %v483 = vld [vmem:[%s242 + $0x48] sm:$0xff]
        %v484 = vld [vmem:[%s242 + $0x68] sm:$0xff]
        %v489 = vunpack.c.l.b16 %v481
        %v490 = vunpack.c.h.b16 %v481
        %v491 = vunpack.c.l.b16 %v482
        %v492 = vunpack.c.h.b16 %v482
        %v493 = vunpack.c.l.b16 %v483
        %v494 = vunpack.c.h.b16 %v483
        %v495 = vunpack.c.l.b16 %v484
        %v496 = vunpack.c.h.b16 %v484
        %v497 = vpack.c.b16 %v491, %v489
        %v498 = vpack.c.b16 %v492, %v490
        %v499 = vpack.c.b16 %v495, %v493
        %v500 = vpack.c.b16 %v496, %v494
        %505 = vmatpush.bf16.msra.mxu0 %v414
        %506 = vmatpush.bf16.msra.mxu0 %v413
        %507 = vmatpush.bf16.msra.mxu0 %v412
        %508 = vmatpush.bf16.msra.mxu0 %v411
        %509 = vmatpush.bf16.msra.mxu0 %v410
        %510 = vmatpush.bf16.msra.mxu0 %v409
        %511 = vmatpush.bf16.msra.mxu0 %v408
        %512 = vmatpush.bf16.msra.mxu0 %v407
        %513 = vmatmul.bf16.gmra.mxu0 %v497
        %v514 = vpop.f32.mrf.mxu0
        %v515 = vadd.f32 0.0, %v514
        %v516 = vpop.f32.mrf.mxu0
        %v517 = vadd.f32 0.0, %v516
        %518 = vmatmul.bf16.gmra.mxu0 %v499
        %v519 = vpop.f32.mrf.mxu0
        %v520 = vadd.f32 0.0, %v519
        %v521 = vpop.f32.mrf.mxu0
        %v522 = vadd.f32 0.0, %v521
        %523 = vdwg.mxu0
        %524 = vmatpush.bf16.msra.mxu0 %v422
        %525 = vmatpush.bf16.msra.mxu0 %v421
        %526 = vmatpush.bf16.msra.mxu0 %v420
        %527 = vmatpush.bf16.msra.mxu0 %v419
        %528 = vmatpush.bf16.msra.mxu0 %v418
        %529 = vmatpush.bf16.msra.mxu0 %v417
        %530 = vmatpush.bf16.msra.mxu0 %v416
        %531 = vmatpush.bf16.msra.mxu0 %v415
        %532 = vmatmul.bf16.gmra.mxu0 %v498
        %v533 = vpop.f32.mrf.mxu0
        %v534 = vadd.f32 %v515, %v533
        %v535 = vpop.f32.mrf.mxu0
        %v536 = vadd.f32 %v517, %v535
        %537 = vmatmul.bf16.gmra.mxu0 %v500
        %v538 = vpop.f32.mrf.mxu0
        %v539 = vadd.f32 %v520, %v538
        %v540 = vpop.f32.mrf.mxu0
        %v541 = vadd.f32 %v522, %v540
        %542 = vdwg.mxu0
        %v543 = vmax.f32 %v534, 0.0
        %v544 = vmax.f32 %v536, 0.0
        %v545 = vmax.f32 %v539, 0.0
        %v546 = vmax.f32 %v541, 0.0
        %v547 = vadd.f32 %v477, %v543
        %v548 = vadd.f32 %v478, %v544
        %v549 = vadd.f32 %v479, %v545
        %v550 = vadd.f32 %v480, %v546
        %v551 = vld [vmem:[%s242 + $0x10] sm:$0xff]
        %v552 = vld [vmem:[%s242 + $0x30] sm:$0xff]
        %v553 = vld [vmem:[%s242 + $0x50] sm:$0xff]
        %v554 = vld [vmem:[%s242 + $0x70] sm:$0xff]
        %v559 = vunpack.c.l.b16 %v551
        %v560 = vunpack.c.h.b16 %v551
        %v561 = vunpack.c.l.b16 %v552
        %v562 = vunpack.c.h.b16 %v552
        %v563 = vunpack.c.l.b16 %v553
        %v564 = vunpack.c.h.b16 %v553
        %v565 = vunpack.c.l.b16 %v554
        %v566 = vunpack.c.h.b16 %v554
        %v567 = vpack.c.b16 %v561, %v559
        %v568 = vpack.c.b16 %v562, %v560
        %v569 = vpack.c.b16 %v565, %v563
        %v570 = vpack.c.b16 %v566, %v564
        %575 = vmatpush.bf16.msra.mxu0 %v414
        %576 = vmatpush.bf16.msra.mxu0 %v413
        %577 = vmatpush.bf16.msra.mxu0 %v412
        %578 = vmatpush.bf16.msra.mxu0 %v411
        %579 = vmatpush.bf16.msra.mxu0 %v410
        %580 = vmatpush.bf16.msra.mxu0 %v409
        %581 = vmatpush.bf16.msra.mxu0 %v408
        %582 = vmatpush.bf16.msra.mxu0 %v407
        %583 = vmatmul.bf16.gmra.mxu0 %v567
        %v584 = vpop.f32.mrf.mxu0
        %v585 = vadd.f32 0.0, %v584
        %v586 = vpop.f32.mrf.mxu0
        %v587 = vadd.f32 0.0, %v586
        %588 = vmatmul.bf16.gmra.mxu0 %v569
        %v589 = vpop.f32.mrf.mxu0
        %v590 = vadd.f32 0.0, %v589
        %v591 = vpop.f32.mrf.mxu0
        %v592 = vadd.f32 0.0, %v591
        %593 = vdwg.mxu0
        %594 = vmatpush.bf16.msra.mxu0 %v422
        %595 = vmatpush.bf16.msra.mxu0 %v421
        %596 = vmatpush.bf16.msra.mxu0 %v420
        %597 = vmatpush.bf16.msra.mxu0 %v419
        %598 = vmatpush.bf16.msra.mxu0 %v418
        %599 = vmatpush.bf16.msra.mxu0 %v417
        %600 = vmatpush.bf16.msra.mxu0 %v416
        %601 = vmatpush.bf16.msra.mxu0 %v415
        %602 = vmatmul.bf16.gmra.mxu0 %v568
        %v603 = vpop.f32.mrf.mxu0
        %v604 = vadd.f32 %v585, %v603
        %v605 = vpop.f32.mrf.mxu0
        %v606 = vadd.f32 %v587, %v605
        %607 = vmatmul.bf16.gmra.mxu0 %v570
        %v608 = vpop.f32.mrf.mxu0
        %v609 = vadd.f32 %v590, %v608
        %v610 = vpop.f32.mrf.mxu0
        %v611 = vadd.f32 %v592, %v610
        %612 = vdwg.mxu0
        %v613 = vmax.f32 %v604, 0.0
        %v614 = vmax.f32 %v606, 0.0
        %v615 = vmax.f32 %v609, 0.0
        %v616 = vmax.f32 %v611, 0.0
        %v617 = vadd.f32 %v547, %v613
        %v618 = vadd.f32 %v548, %v614
        %v619 = vadd.f32 %v549, %v615
        %v620 = vadd.f32 %v550, %v616
        %v621 = vld [vmem:[%s242 + $0x18] sm:$0xff]
        %v622 = vld [vmem:[%s242 + $0x38] sm:$0xff]
        %v623 = vld [vmem:[%s242 + $0x58] sm:$0xff]
        %v624 = vld [vmem:[%s242 + $0x78] sm:$0xff]
        %v629 = vunpack.c.l.b16 %v621
        %v630 = vunpack.c.h.b16 %v621
        %v631 = vunpack.c.l.b16 %v622
        %v632 = vunpack.c.h.b16 %v622
        %v633 = vunpack.c.l.b16 %v623
        %v634 = vunpack.c.h.b16 %v623
        %v635 = vunpack.c.l.b16 %v624
        %v636 = vunpack.c.h.b16 %v624
        %v637 = vpack.c.b16 %v631, %v629
        %v638 = vpack.c.b16 %v632, %v630
        %v639 = vpack.c.b16 %v635, %v633
        %v640 = vpack.c.b16 %v636, %v634
        %645 = vmatpush.bf16.msra.mxu0 %v414
        %646 = vmatpush.bf16.msra.mxu0 %v413
        %647 = vmatpush.bf16.msra.mxu0 %v412
        %648 = vmatpush.bf16.msra.mxu0 %v411
        %649 = vmatpush.bf16.msra.mxu0 %v410
        %650 = vmatpush.bf16.msra.mxu0 %v409
        %651 = vmatpush.bf16.msra.mxu0 %v408
        %652 = vmatpush.bf16.msra.mxu0 %v407
        %653 = vmatmul.bf16.gmra.mxu0 %v637
        %v654 = vpop.f32.mrf.mxu0
        %v655 = vadd.f32 0.0, %v654
        %v656 = vpop.f32.mrf.mxu0
        %v657 = vadd.f32 0.0, %v656
        %658 = vmatmul.bf16.gmra.mxu0 %v639
        %v659 = vpop.f32.mrf.mxu0
        %v660 = vadd.f32 0.0, %v659
        %v661 = vpop.f32.mrf.mxu0
        %v662 = vadd.f32 0.0, %v661
        %663 = vdwg.mxu0
        %664 = vmatpush.bf16.msra.mxu0 %v422
        %665 = vmatpush.bf16.msra.mxu0 %v421
        %666 = vmatpush.bf16.msra.mxu0 %v420
        %667 = vmatpush.bf16.msra.mxu0 %v419
        %668 = vmatpush.bf16.msra.mxu0 %v418
        %669 = vmatpush.bf16.msra.mxu0 %v417
        %670 = vmatpush.bf16.msra.mxu0 %v416
        %671 = vmatpush.bf16.msra.mxu0 %v415
        %672 = vmatmul.bf16.gmra.mxu0 %v638
        %v673 = vpop.f32.mrf.mxu0
        %v674 = vadd.f32 %v655, %v673
        %v675 = vpop.f32.mrf.mxu0
        %v676 = vadd.f32 %v657, %v675
        %677 = vmatmul.bf16.gmra.mxu0 %v640
        %v678 = vpop.f32.mrf.mxu0
        %v679 = vadd.f32 %v660, %v678
        %v680 = vpop.f32.mrf.mxu0
        %v681 = vadd.f32 %v662, %v680
        %682 = vdwg.mxu0
        %v683 = vmax.f32 %v674, 0.0
        %v684 = vmax.f32 %v676, 0.0
        %v685 = vmax.f32 %v679, 0.0
        %v686 = vmax.f32 %v681, 0.0
        %v687 = vadd.f32 %v617, %v683
        %v688 = vadd.f32 %v618, %v684
        %v689 = vadd.f32 %v619, %v685
        %v690 = vadd.f32 %v620, %v686
        %v691 = vld [vmem:[%s282] sm:$0x1]
        %v693 = vperm.slane %v691, 0
        %v695 = vmul.f32 %v687, %v693
        %v696 = vmul.f32 %v688, %v693
        %v697 = vmul.f32 %v689, %v693
        %v698 = vmul.f32 %v690, %v693
        %v699 = vld [vmem:[%s285] sm:$0x1]
        %v701 = vperm.slane %v699, 0
        %v703 = vadd.f32 %v695, %v701
        %v704 = vadd.f32 %v696, %v701
        %v705 = vadd.f32 %v697, %v701
        %v706 = vadd.f32 %v698, %v701
        %707 = vst [vmem:[%s278] sm:$0xff] %v703
        %708 = vst [vmem:[%s278 + $0x8] sm:$0xff] %v704
        %709 = vst [vmem:[%s278 + $0x10] sm:$0xff] %v705
        %710 = vst [vmem:[%s278 + $0x18] sm:$0xff] %v706
        %s711 = sand.u32 %s148, 1
        %s712 = scalar_lea.sflag [#allocation4], %s711
        %s713 = sand.u32 %s148, 1
        %s714 = smul.addr %s713, 32
        %s715 = scalar_lea.vmem [#allocation7], %s714
        // Predicated region
        $region45: #{tpu_custom_call.1} parent=35 // pred_check
          %p716 = pneg %p158
        $region46: #{tpu_custom_call.1} parent=35 // pred_check_branch
          %718 = sbr.rel (%p716) target = $region48
        $region47: #{tpu_custom_call.1} parent=35 // pred_region
          %s719 = smul.u32 4, %s26
          %721 = vsyncadd %s712, 0
          %s722 = sadd.s32 %s27, %s719
          %s723 = smul.addr %s722, 8
          %s724 = scalar_lea.hbm %s4, %s723
          %s725 = sshll.u32 %s715, 4
          %s726 = int_to_ptr.vmem [resolvable:$true] %s725
          %s727 = sshll.u32 %s724, 4
          %s728 = int_to_ptr.hbm [resolvable:$true] %s727
          %733 = dma.vmem_to_hbm [thread:$0]  %s726, 512, %s728, %s712, 128, 128, 8
        $region48: #{tpu_custom_call.1} parent=35 // pred_fallthru
          _
      $region36: #{tpu_custom_call.1} parent=5 // pred_fallthru
        _
      %p734 = scmp.le.s32.totalorder 2, %s17
      // Predicated region
      $region49: #{tpu_custom_call.1} parent=5 // pred_check
        %p735 = pneg %p734
      $region50: #{tpu_custom_call.1} parent=5 // pred_check_branch
        %737 = sbr.rel (%p735) target = $region52
      $region51: #{tpu_custom_call.1} parent=5 // pred_region
        %s738 = ssub.s32 %s17, 2
        // Predicated region
        $region53: #{tpu_custom_call.1} parent=51 // pred_check
          %p739 = pneg %p164
        $region54: #{tpu_custom_call.1} parent=51 // pred_check_branch
          %741 = sbr.rel (%p739) target = $region56
        $region55: #{tpu_custom_call.1} parent=51 // pred_region
          %s742 = sand.u32 %s149, 1
          %s743 = scalar_lea.sflag [#allocation4], %s742
          %s744 = sand.u32 %s149, 1
          %s745 = smul.addr %s744, 32
          %s746 = scalar_lea.vmem [#allocation7], %s745
          %748 = dma.done %s743, 512
        $region56: #{tpu_custom_call.1} parent=51 // pred_fallthru
          _
      $region52: #{tpu_custom_call.1} parent=5 // pred_fallthru
        _
    $region6: #{tpu_custom_call.1} parent=1 // loop_footer
      %s21 = sadd.s32 1, %s17
    $region7: #{tpu_custom_call.1} parent=1 // loop_footer_branch
      %16 = sbr.rel target = $region3
    $region8: #{tpu_custom_call.1} parent=1 // loop_exit
      _
    %749 = vsyncpa [#allocation3], 1
    %s750 = scalar_lea.sflag [#allocation3], 1
    %751 = vsyncpa %s750, 1
    %752 = vsyncpa [#allocation6], 1
    %753 = vsyncpa [#allocation4], 1
    %s754 = scalar_lea.sflag [#allocation4], 1
    %755 = vsyncpa %s754, 1

</llo_original>
